<compile_context>
chip_gen: v7x
topology: tpu7x:2x2x1
jax: 0.10.0
libtpu: 0.0.40
codegen_flags: <defaults>
</compile_context>

<pallas_src>
import math
import functools

import jax
import jax.numpy as jnp
from jax.experimental import pallas as pl
from jax.experimental.pallas import tpu as pltpu


# ----------------------------------------------------------------------------
# small helpers
# ----------------------------------------------------------------------------
def _layer_norm(y, gamma, beta, eps=1e-12):
    mu = jnp.mean(y, axis=-1, keepdims=True)
    var = jnp.mean((y - mu) ** 2, axis=-1, keepdims=True)
    return (y - mu) * jax.lax.rsqrt(var + eps) * gamma + beta


def _gelu_exact(x):
    # HF BERT default hidden_act = "gelu" (erf-based, exact).
    # TODO(synk): on v5e the single f32-only EUP may bind here; switch to the
    # tanh approximation only if the downstream tolerance contract allows it.
    return 0.5 * x * (1.0 + jax.lax.erf(x * (1.0 / math.sqrt(2.0))))


def _pick_tile(S, preferred):
    """Largest tile <= preferred that divides S (falls back to whole S)."""
    if S <= preferred:
        return S
    for t in (preferred, 128, 64, 32, 16, 8):
        if t <= S and S % t == 0:
            return t
    # TODO(synk): pad ragged sequence lengths to a multiple of 8/128 instead.
    return S


def _vmem_limit_bytes():
    """Generation-aware scoped-VMEM limit (~85% of physical per-core VMEM)."""
    try:
        cap = int(pltpu.get_tpu_info().vmem_capacity_bytes)
    except Exception:  # hardware-info query unavailable -> conservative default
        cap = 64 * 1024 * 1024
    return max(32 * 1024 * 1024, int(cap * 0.85))


@functools.lru_cache(maxsize=1)
def _single_buffered_supported():
    """Probe (once) whether pipeline_mode=pl.Buffered(1) lowers & runs here.

    The probe kernel is trivial, so any failure means exactly "Buffered(1)
    unsupported on this JAX/TPU" — the real kernels below are never wrapped in
    a try/except, so real lowering errors are never silently masked.
    """
    if not hasattr(pl, "Buffered"):
        return False

    def _probe(x_ref, w_ref, o_ref):
        o_ref[...] = x_ref[...] + w_ref[...]

    try:
        w_spec = pl.BlockSpec((8, 128), lambda i: (0, 0),
                              pipeline_mode=pl.Buffered(1))
        fn = pl.pallas_call(
            _probe,
            out_shape=jax.ShapeDtypeStruct((8, 128), jnp.float32),
            grid=(1,),
            in_specs=[pl.BlockSpec((8, 128), lambda i: (0, 0)), w_spec],
            out_specs=pl.BlockSpec((8, 128), lambda i: (0, 0)),
        )
        z = jnp.zeros((8, 128), jnp.float32)
        jax.block_until_ready(fn(z, z))
        return True
    except Exception:
        return False


# ----------------------------------------------------------------------------
# Kernel A: fused QKV projection (scale folded into Q), outputs bf16
# ----------------------------------------------------------------------------
def _qkv_proj_kernel(x_ref, wqkv_ref, bqkv_ref, q_ref, k_ref, v_ref, *, hidden):
    xb = x_ref[0].astype(jnp.bfloat16)                      # (Ts, H)
    qkv = jnp.dot(xb, wqkv_ref[...],
                  preferred_element_type=jnp.float32) + bqkv_ref[...]
    qkv = qkv.astype(jnp.bfloat16)                          # (Ts, 3H)
    q_ref[0] = qkv[:, :hidden]
    k_ref[0] = qkv[:, hidden:2 * hidden]
    v_ref[0] = qkv[:, 2 * hidden:]


# ----------------------------------------------------------------------------
# Kernel B: flash attention (online softmax over kv tiles) + self-output
#           LayerNorm + adapter1 + feed-forward chunk, per (batch, q-tile)
# ----------------------------------------------------------------------------
def _attn_ffn_kernel(
    x_ref, mask_ref, q_ref, k_ref, v_ref,
    wo_ref, bo_ref, g1_ref, be1_ref,
    wd_ref, bd_ref, wu_ref, bu_ref,
    wi_ref, bi_ref, wo2_ref, bo2_ref, g2_ref, be2_ref,
    out_ref,
    qh_scr, m_scr, l_scr, acc_scr,
    *, num_heads, head_dim,
):
    tq = q_ref.shape[1]
    tk = k_ref.shape[1]
    hidden = q_ref.shape[2]
    ki = pl.program_id(2)

    @pl.when(ki == 0)
    def _init():
        # Q tile is already pre-scaled by 1/sqrt(dh); split heads once, in bf16.
        qh_scr[...] = q_ref[0].reshape(tq, num_heads, head_dim).swapaxes(0, 1)
        m_scr[...] = jnp.full(m_scr.shape, -jnp.inf, m_scr.dtype)
        l_scr[...] = jnp.zeros(l_scr.shape, l_scr.dtype)
        acc_scr[...] = jnp.zeros(acc_scr.shape, acc_scr.dtype)

    # K/V head split in bf16 (cheap relayout relative to the matmuls).
    kh = k_ref[0].reshape(tk, num_heads, head_dim).swapaxes(0, 1)   # (nh,Tk,dh)
    vh = v_ref[0].reshape(tk, num_heads, head_dim).swapaxes(0, 1)

    # Head-batched scores for this kv tile; mask broadcast over heads/queries.
    s = jnp.einsum("hqd,hkd->hqk", qh_scr[...], kh,
                   preferred_element_type=jnp.float32)              # (nh,Tq,Tk)
    s = s + mask_ref[0].astype(jnp.float32)[None, :, :]

    # Online-softmax update (f32).
    m_prev = m_scr[...]
    m_new = jnp.maximum(m_prev, jnp.max(s, axis=-1, keepdims=True))
    alpha = jnp.exp(m_prev - m_new)
    p = jnp.exp(s - m_new)
    l_scr[...] = alpha * l_scr[...] + jnp.sum(p, axis=-1, keepdims=True)
    acc_scr[...] = alpha * acc_scr[...] + jnp.einsum(
        "hqk,hkd->hqd", p.astype(jnp.bfloat16), vh,
        preferred_element_type=jnp.float32)
    m_scr[...] = m_new

    @pl.when(ki == pl.num_programs(2) - 1)
    def _finalize():
        inv_l = pl.reciprocal(l_scr[...], approx=True)               # EUP slot
        ctx = (acc_scr[...] * inv_l).astype(jnp.bfloat16)            # (nh,Tq,dh)
        ctx = ctx.swapaxes(0, 1).reshape(tq, hidden)                 # merge heads (bf16)
        x_q = x_ref[0].astype(jnp.float32)                           # residual, f32

        # BertSelfOutput: dense + residual + LayerNorm
        attn_dense = jnp.dot(ctx, wo_ref[...],
                             preferred_element_type=jnp.float32) + bo_ref[...]
        attn_out = _layer_norm(attn_dense + x_q, g1_ref[...], be1_ref[...])

        # adapter1: down -> relu -> up -> residual
        a = jnp.dot(attn_out.astype(jnp.bfloat16), wd_ref[...],
                    preferred_element_type=jnp.float32) + bd_ref[...]
        a = jnp.maximum(a, 0.0)
        a = jnp.dot(a.astype(jnp.bfloat16), wu_ref[...],
                    preferred_element_type=jnp.float32) + bu_ref[...]
        attn_out = a + attn_out

        # feed_forward_chunk (bert_layer's own: adapter2 is NOT applied)
        inter = jnp.dot(attn_out.astype(jnp.bfloat16), wi_ref[...],
                        preferred_element_type=jnp.float32) + bi_ref[...]
        inter = _gelu_exact(inter)
        ffn = jnp.dot(inter.astype(jnp.bfloat16), wo2_ref[...],
                      preferred_element_type=jnp.float32) + bo2_ref[...]
        out_ref[0] = _layer_norm(ffn + attn_out,
                                 g2_ref[...], be2_ref[...]).astype(out_ref.dtype)


# ----------------------------------------------------------------------------
# wrapper
# ----------------------------------------------------------------------------
_ATTN_WEIGHT_KEYS = ("wo", "bo", "g1", "be1", "wd", "bd", "wu", "bu",
                     "wi", "bi", "wo2", "bo2", "g2", "be2")
_BF16_WEIGHTS = {"wo", "wd", "wu", "wi", "wo2"}


def adapted_bert_layer(x, attn_mask, params, *, num_heads,
                       q_tile=256, kv_tile=256, out_dtype=jnp.float32):
    """AdaptedBERTLayer forward (non-decoder, eval mode).

    q_tile/kv_tile: sequence tiles. 256 matches the v6e/v7x 256-wide MXU;
    use 128 on v5e.  out_dtype=jnp.bfloat16 halves output writeback if the
    consumer re-casts anyway.
    """
    B, S, H = x.shape
    assert H % num_heads == 0, "hidden size must be divisible by num_heads"
    head_dim = H // num_heads
    inter_dim = params["wi"].shape[1]
    bottleneck = params["wd"].shape[1]

    if attn_mask is None:
        attn_mask = jnp.zeros((B, 1, S), jnp.float32)
    attn_mask = attn_mask.astype(jnp.float32)

    tq = _pick_tile(S, q_tile)
    tk = _pick_tile(S, kv_tile)

    # Fused QKV weight/bias, with 1/sqrt(dh) folded into the Q slice (scaling
    # S*H elements of Q instead of nh*S*S score elements).
    scale = 1.0 / math.sqrt(head_dim)
    wqkv = jnp.concatenate([params["wq"] * scale, params["wk"], params["wv"]],
                           axis=1).astype(jnp.bfloat16)
    bqkv = jnp.concatenate([params["bq"] * scale, params["bk"], params["bv"]],
                           axis=1).astype(jnp.float32)

    weight_args = []
    for key in _ATTN_WEIGHT_KEYS:
        w = params[key]
        w = w.astype(jnp.bfloat16) if key in _BF16_WEIGHTS else w.astype(jnp.float32)
        weight_args.append(w)

    vmem_limit = _vmem_limit_bytes()
    single_buf = _single_buffered_supported()

    def wspec(arr):
        ndim = arr.ndim
        idx = lambda *_: (0,) * ndim          # constant block index across grid
        if single_buf:
            return pl.BlockSpec(arr.shape, idx, pipeline_mode=pl.Buffered(1))
        return pl.BlockSpec(arr.shape, idx)

    # ---------------- Kernel A: fused QKV projection ----------------
    qkv_cost = pl.CostEstimate(
        flops=int(2 * B * S * H * 3 * H),
        transcendentals=0,
        bytes_accessed=int(x.size * x.dtype.itemsize + wqkv.size * 2
                           + bqkv.size * 4 + 3 * B * S * H * 2),
    )
    q, k, v = pl.pallas_call(
        functools.partial(_qkv_proj_kernel, hidden=H),
        out_shape=tuple(jax.ShapeDtypeStruct((B, S, H), jnp.bfloat16)
                        for _ in range(3)),
        grid=(B, S // tq),
        in_specs=[
            pl.BlockSpec((1, tq, H), lambda b, si: (b, si, 0)),
            wspec(wqkv),
            wspec(bqkv),
        ],
        out_specs=tuple(pl.BlockSpec((1, tq, H), lambda b, si: (b, si, 0))
                        for _ in range(3)),
        compiler_params=pltpu.CompilerParams(
            dimension_semantics=("parallel", "parallel"),
            vmem_limit_bytes=vmem_limit),
        cost_estimate=qkv_cost,
    )(x, wqkv, bqkv)

    # ------------- Kernel B: attention + adapter1 + FFN --------------
    flops_b = int(B * (4 * S * S * H + 2 * S * H * H
                       + 4 * S * H * bottleneck + 4 * S * H * inter_dim))
    trans_b = int(B * (num_heads * S * S + S * inter_dim))
    bytes_b = int(x.size * x.dtype.itemsize
                  + attn_mask.size * 4
                  + 3 * B * S * H * 2
                  + sum(int(w.size) * w.dtype.itemsize for w in weight_args)
                  + B * S * H * jnp.dtype(out_dtype).itemsize)
    attn_cost = pl.CostEstimate(flops=flops_b, transcendentals=trans_b,
                                bytes_accessed=bytes_b)

    out = pl.pallas_call(
        functools.partial(_attn_ffn_kernel,
                          num_heads=num_heads, head_dim=head_dim),
        out_shape=jax.ShapeDtypeStruct((B, S, H), out_dtype),
        grid=(B, S // tq, S // tk),
        in_specs=[
            pl.BlockSpec((1, tq, H), lambda b, qi, ki: (b, qi, 0)),   # residual x
            pl.BlockSpec((1, 1, tk), lambda b, qi, ki: (b, 0, ki)),   # additive mask
            pl.BlockSpec((1, tq, H), lambda b, qi, ki: (b, qi, 0)),   # Q (pre-scaled)
            pl.BlockSpec((1, tk, H), lambda b, qi, ki: (b, ki, 0)),   # K
            pl.BlockSpec((1, tk, H), lambda b, qi, ki: (b, ki, 0)),   # V
        ] + [wspec(w) for w in weight_args],
        out_specs=pl.BlockSpec((1, tq, H), lambda b, qi, ki: (b, qi, 0)),
        scratch_shapes=[
            pltpu.VMEM((num_heads, tq, head_dim), jnp.bfloat16),   # Q heads cache
            pltpu.VMEM((num_heads, tq, 1), jnp.float32),           # running max m
            pltpu.VMEM((num_heads, tq, 1), jnp.float32),           # running sum l
            pltpu.VMEM((num_heads, tq, head_dim), jnp.float32),    # softmax acc
        ],
        compiler_params=pltpu.CompilerParams(
            dimension_semantics=("parallel", "parallel", "arbitrary"),
            vmem_limit_bytes=vmem_limit),
        cost_estimate=attn_cost,
    )(x, attn_mask, q, k, v, *weight_args)
    return out


# ----------------------------------------------------------------------------
# pure-JAX f32 reference (identical semantics) + synthetic parameters
# ----------------------------------------------------------------------------
def reference_forward(x, attn_mask, params, num_heads):
    B, S, H = x.shape
    dh = H // num_heads

    def ln(y, g, b):
        mu = y.mean(-1, keepdims=True)
        var = ((y - mu) ** 2).mean(-1, keepdims=True)
        return (y - mu) / jnp.sqrt(var + 1e-12) * g + b

    q = x @ params["wq"] + params["bq"]
    k = x @ params["wk"] + params["bk"]
    v = x @ params["wv"] + params["bv"]
    q = q.reshape(B, S, num_heads, dh).transpose(0, 2, 1, 3)
    k = k.reshape(B, S, num_heads, dh).transpose(0, 2, 1, 3)
    v = v.reshape(B, S, num_heads, dh).transpose(0, 2, 1, 3)
    s = jnp.einsum("bhqd,bhkd->bhqk", q, k) / math.sqrt(dh) + attn_mask[:, None, :, :]
    p = jax.nn.softmax(s, axis=-1)
    ctx = jnp.einsum("bhqk,bhkd->bhqd", p, v).transpose(0, 2, 1, 3).reshape(B, S, H)
    attn = ln(ctx @ params["wo"] + params["bo"] + x, params["g1"], params["be1"])
    a = jnp.maximum(attn @ params["wd"] + params["bd"], 0.0) @ params["wu"] + params["bu"]
    attn = a + attn
    inter = attn @ params["wi"] + params["bi"]
    inter = 0.5 * inter * (1.0 + jax.lax.erf(inter / math.sqrt(2.0)))
    ffn = inter @ params["wo2"] + params["bo2"]
    return ln(ffn + attn, params["g2"], params["be2"])


def make_params(key, H, I, bottleneck):
    """Deterministic synthetic parameters (shapes match the PyTorch module).

    adapter2 parameters exist in the module but are unused in forward()
    (it calls bert_layer.feed_forward_chunk, not the adapted one), so they
    are omitted here.
    """
    ks = jax.random.split(key, 20)
    n = lambda k, shape, std: (std * jax.random.normal(k, shape)).astype(jnp.float32)
    return {
        "wq": n(ks[0], (H, H), 0.02), "bq": n(ks[1], (1, H), 0.02),
        "wk": n(ks[2], (H, H), 0.02), "bk": n(ks[3], (1, H), 0.02),
        "wv": n(ks[4], (H, H), 0.02), "bv": n(ks[5], (1, H), 0.02),
        "wo": n(ks[6], (H, H), 0.02), "bo": n(ks[7], (1, H), 0.02),
        "g1": 1.0 + n(ks[8], (1, H), 0.02), "be1": n(ks[9], (1, H), 0.02),
        "wd": n(ks[10], (H, bottleneck), 0.01), "bd": n(ks[11], (1, bottleneck), 0.01),
        "wu": n(ks[12], (bottleneck, H), 0.01), "bu": n(ks[13], (1, H), 0.01),
        "wi": n(ks[14], (H, I), 0.02), "bi": n(ks[15], (1, I), 0.02),
        "wo2": n(ks[16], (I, H), 0.02), "bo2": n(ks[17], (1, H), 0.02),
        "g2": 1.0 + n(ks[18], (1, H), 0.02), "be2": n(ks[19], (1, H), 0.02),
    }


if __name__ == "__main__":
    def run_case(B, S, H, num_heads, I, bottleneck, q_tile, kv_tile, masked):
        key = jax.random.PRNGKey(0)
        kx, kp = jax.random.split(key)
        x = jax.random.normal(kx, (B, S, H), dtype=jnp.float32)
        if masked:
            # HF-style additive mask: last quarter of key positions masked out.
            keep = (jnp.arange(S) < (3 * S) // 4).astype(jnp.float32)
            attn_mask = jnp.broadcast_to(((keep - 1.0) * 10000.0).reshape(1, 1, S),
                                         (B, 1, S))
        else:
            attn_mask = jnp.zeros((B, 1, S), jnp.float32)
        params = make_params(kp, H, I, bottleneck)

        out = adapted_bert_layer(x, attn_mask, params, num_heads=num_heads,
                                 q_tile=q_tile, kv_tile=kv_tile)
        out = jax.block_until_ready(out)
        assert out.shape == (B, S, H)

        ref = reference_forward(x, attn_mask, params, num_heads)
        err = float(jnp.max(jnp.abs(out - ref)))
        # bf16 MXU matmuls (f32 accumulation) + approx reciprocal -> loose tol.
        assert err < 5e-2, f"max abs error {err}"
        return err

    # Small sanity case (single tile per axis), per harness requirements.
    run_case(B=2, S=8, H=32, num_heads=4, I=128, bottleneck=16,
             q_tile=256, kv_tile=256, masked=False)
    # Multi-tile case: exercises the online-softmax accumulation across kv
    # tiles, multiple q tiles, and masked key positions at aligned (8,128) tiles.
    run_case(B=1, S=256, H=128, num_heads=4, I=512, bottleneck=32,
             q_tile=128, kv_tile=128, masked=True)

    print("KERNEL_OK")
</pallas_src>

<mosaic_0001>
module attributes {stable_mosaic.version = 11 : i64} {
  func.func @_probe(%arg0: i32, %arg1: memref<8x128xf32, #tpu.memory_space<vmem>>, %arg2: memref<8x128xf32, #tpu.memory_space<vmem>>, %arg3: memref<8x128xf32, #tpu.memory_space<vmem>>) attributes {dimension_semantics = [#tpu.dimension_semantics<arbitrary>], iteration_bounds = array<i64: 1>, scalar_prefetch = 0 : i64, scratch_operands = 0 : i64, tpu.core_type = #tpu.core_type<tc>, window_params = [{pipeline_mode = #tpu.pipeline_mode<synchronous>, transform_indices = @transform_0, window_bounds = array<i64: 8, 128>}, {pipeline_mode = #tpu.pipeline_mode<synchronous>, transform_indices = @transform_1, window_bounds = array<i64: 8, 128>}, {pipeline_mode = #tpu.pipeline_mode<synchronous>, transform_indices = @transform_2, window_bounds = array<i64: 8, 128>}]} {
    %c0 = arith.constant 0 : index
    %c0_0 = arith.constant 0 : index
    %0 = vector.load %arg1[%c0, %c0_0] : memref<8x128xf32, #tpu.memory_space<vmem>>, vector<8x128xf32>
    %c0_1 = arith.constant 0 : index
    %c0_2 = arith.constant 0 : index
    %1 = vector.load %arg2[%c0_1, %c0_2] : memref<8x128xf32, #tpu.memory_space<vmem>>, vector<8x128xf32>
    %2 = arith.addf %0, %1 : vector<8x128xf32>
    %c0_3 = arith.constant 0 : index
    %c0_4 = arith.constant 0 : index
    %3 = vector.load %arg3[%c0_3, %c0_4] : memref<8x128xf32, #tpu.memory_space<vmem>>, vector<8x128xf32>
    tpu.vector_store %arg3[%c0_3, %c0_4], %2 {strides = array<i32>} : memref<8x128xf32, #tpu.memory_space<vmem>>, vector<8x128xf32>,
    return
  }
  func.func @transform_0(%arg0: i32) -> (i32, i32) {
    %c0_i32 = arith.constant 0 : i32
    %c0_i32_0 = arith.constant 0 : i32
    %c0_i32_1 = arith.constant 0 : i32
    return %c0_i32, %c0_i32_0 : i32, i32
  }
  func.func @transform_1(%arg0: i32) -> (i32, i32) {
    %c0_i32 = arith.constant 0 : i32
    %c0_i32_0 = arith.constant 0 : i32
    %c0_i32_1 = arith.constant 0 : i32
    return %c0_i32, %c0_i32_0 : i32, i32
  }
  func.func @transform_2(%arg0: i32) -> (i32, i32) {
    %c0_i32 = arith.constant 0 : i32
    %c0_i32_0 = arith.constant 0 : i32
    %c0_i32_1 = arith.constant 0 : i32
    return %c0_i32, %c0_i32_0 : i32, i32
  }
}

module attributes {stable_mosaic.version = 11 : i64} {
  func.func @_qkv_proj_kernel(%arg0: i32, %arg1: i32, %arg2: memref<1x8x32xf32, #tpu.memory_space<vmem>>, %arg3: memref<32x96xbf16, #tpu.memory_space<vmem>>, %arg4: memref<1x96xf32, #tpu.memory_space<vmem>>, %arg5: memref<1x8x32xbf16, #tpu.memory_space<vmem>>, %arg6: memref<1x8x32xbf16, #tpu.memory_space<vmem>>, %arg7: memref<1x8x32xbf16, #tpu.memory_space<vmem>>) attributes {dimension_semantics = [#tpu.dimension_semantics<parallel>, #tpu.dimension_semantics<parallel>], iteration_bounds = array<i64: 2, 1>, scalar_prefetch = 0 : i64, scratch_operands = 0 : i64, tpu.core_type = #tpu.core_type<tc>, window_params = [{transform_indices = @transform_0, window_bounds = array<i64: 1, 8, 32>}, {pipeline_mode = #tpu.pipeline_mode<synchronous>, transform_indices = @transform_1, window_bounds = array<i64: 32, 96>}, {pipeline_mode = #tpu.pipeline_mode<synchronous>, transform_indices = @transform_2, window_bounds = array<i64: 1, 96>}, {transform_indices = @transform_3, window_bounds = array<i64: 1, 8, 32>}, {transform_indices = @transform_4, window_bounds = array<i64: 1, 8, 32>}, {transform_indices = @transform_5, window_bounds = array<i64: 1, 8, 32>}]} {
    %c0 = arith.constant 0 : index
    %c0_0 = arith.constant 0 : index
    %c0_1 = arith.constant 0 : index
    %0 = vector.load %arg2[%c0, %c0_0, %c0_1] : memref<1x8x32xf32, #tpu.memory_space<vmem>>, vector<1x8x32xf32>
    %1 = vector.shape_cast %0 : vector<1x8x32xf32> to vector<8x32xf32>
    %2 = arith.truncf %1 : vector<8x32xf32> to vector<8x32xbf16>
    %c0_2 = arith.constant 0 : index
    %c0_3 = arith.constant 0 : index
    %3 = vector.load %arg3[%c0_2, %c0_3] : memref<32x96xbf16, #tpu.memory_space<vmem>>, vector<32x96xbf16>
    %cst = arith.constant dense<0.000000e+00> : vector<8x96xf32>
    %4 = tpu.matmul %2, %3, %cst {dimension_numbers = #tpu.dot_dimension_numbers<[1], [0], [0], [1], [0, 0, 1, 1], [], []>} : vector<8x32xbf16>, vector<32x96xbf16>, vector<8x96xf32> -> vector<8x96xf32>
    %c0_4 = arith.constant 0 : index
    %c0_5 = arith.constant 0 : index
    %5 = vector.load %arg4[%c0_4, %c0_5] : memref<1x96xf32, #tpu.memory_space<vmem>>, vector<1x96xf32>
    %6 = vector.broadcast %5 : vector<1x96xf32> to vector<8x96xf32>
    %7 = arith.addf %4, %6 : vector<8x96xf32>
    %8 = arith.truncf %7 : vector<8x96xf32> to vector<8x96xbf16>
    %9 = vector.extract_strided_slice %8 {offsets = [0, 0], sizes = [8, 32], strides = [1, 1]} : vector<8x96xbf16> to vector<8x32xbf16>
    %c0_6 = arith.constant 0 : index
    %c0_7 = arith.constant 0 : index
    %c0_8 = arith.constant 0 : index
    %10 = vector.load %arg5[%c0_6, %c0_7, %c0_8] : memref<1x8x32xbf16, #tpu.memory_space<vmem>>, vector<1x8x32xbf16>
    %11 = vector.shape_cast %10 : vector<1x8x32xbf16> to vector<8x32xbf16>
    %12 = vector.shape_cast %9 : vector<8x32xbf16> to vector<1x8x32xbf16>
    tpu.vector_store %arg5[%c0_6, %c0_7, %c0_8], %12 {strides = array<i32>} : memref<1x8x32xbf16, #tpu.memory_space<vmem>>, vector<1x8x32xbf16>,
    %13 = vector.extract_strided_slice %8 {offsets = [0, 32], sizes = [8, 32], strides = [1, 1]} : vector<8x96xbf16> to vector<8x32xbf16>
    %c0_9 = arith.constant 0 : index
    %c0_10 = arith.constant 0 : index
    %c0_11 = arith.constant 0 : index
    %14 = vector.load %arg6[%c0_9, %c0_10, %c0_11] : memref<1x8x32xbf16, #tpu.memory_space<vmem>>, vector<1x8x32xbf16>
    %15 = vector.shape_cast %14 : vector<1x8x32xbf16> to vector<8x32xbf16>
    %16 = vector.shape_cast %13 : vector<8x32xbf16> to vector<1x8x32xbf16>
    tpu.vector_store %arg6[%c0_9, %c0_10, %c0_11], %16 {strides = array<i32>} : memref<1x8x32xbf16, #tpu.memory_space<vmem>>, vector<1x8x32xbf16>,
    %17 = vector.extract_strided_slice %8 {offsets = [0, 64], sizes = [8, 32], strides = [1, 1]} : vector<8x96xbf16> to vector<8x32xbf16>
    %c0_12 = arith.constant 0 : index
    %c0_13 = arith.constant 0 : index
    %c0_14 = arith.constant 0 : index
    %18 = vector.load %arg7[%c0_12, %c0_13, %c0_14] : memref<1x8x32xbf16, #tpu.memory_space<vmem>>, vector<1x8x32xbf16>
    %19 = vector.shape_cast %18 : vector<1x8x32xbf16> to vector<8x32xbf16>
    %20 = vector.shape_cast %17 : vector<8x32xbf16> to vector<1x8x32xbf16>
    tpu.vector_store %arg7[%c0_12, %c0_13, %c0_14], %20 {strides = array<i32>} : memref<1x8x32xbf16, #tpu.memory_space<vmem>>, vector<1x8x32xbf16>,
    return
  }
  func.func @transform_0(%arg0: i32, %arg1: i32) -> (i32, i32, i32) {
    %c0_i32 = arith.constant 0 : i32
    %c0_i32_0 = arith.constant 0 : i32
    return %arg0, %arg1, %c0_i32 : i32, i32, i32
  }
  func.func @transform_1(%arg0: i32, %arg1: i32) -> (i32, i32) {
    %c0_i32 = arith.constant 0 : i32
    %c0_i32_0 = arith.constant 0 : i32
    %c0_i32_1 = arith.constant 0 : i32
    return %c0_i32, %c0_i32_0 : i32, i32
  }
  func.func @transform_2(%arg0: i32, %arg1: i32) -> (i32, i32) {
    %c0_i32 = arith.constant 0 : i32
    %c0_i32_0 = arith.constant 0 : i32
    %c0_i32_1 = arith.constant 0 : i32
    return %c0_i32, %c0_i32_0 : i32, i32
  }
  func.func @transform_3(%arg0: i32, %arg1: i32) -> (i32, i32, i32) {
    %c0_i32 = arith.constant 0 : i32
    %c0_i32_0 = arith.constant 0 : i32
    return %arg0, %arg1, %c0_i32 : i32, i32, i32
  }
  func.func @transform_4(%arg0: i32, %arg1: i32) -> (i32, i32, i32) {
    %c0_i32 = arith.constant 0 : i32
    %c0_i32_0 = arith.constant 0 : i32
    return %arg0, %arg1, %c0_i32 : i32, i32, i32
  }
  func.func @transform_5(%arg0: i32, %arg1: i32) -> (i32, i32, i32) {
    %c0_i32 = arith.constant 0 : i32
    %c0_i32_0 = arith.constant 0 : i32
    return %arg0, %arg1, %c0_i32 : i32, i32, i32
  }
}

</mosaic_0001>

<llo_original>
// kernel: tpu_custom_call.1
$region0: #{tpu_custom_call.1}
  #allocation0 [shape = 'u32[]', space=smem, size = 0x4, offset = 0x4, fixed_abs, tag = 'smem constant byte address 0x4 - core index']
  #allocation1 [shape = 'u32[144,128]{1,0:T(1,128)}', space=vmem, size = 0x12000, scoped, tag = 'internal scratch']
  %s0 = inlined_call_operand.hbm [shape: f32[8,128], index: 0, kind: input, shape index: {}]
  %s1 = inlined_call_operand.hbm [shape: f32[8,128], index: 1, kind: input, shape index: {}]
  %s2 = inlined_call_operand.hbm [shape: f32[8,128], index: 2, kind: output, shape index: {}]
  %s3 = sld [smem:[#allocation0]]
  $region26: #{tpu_custom_call.1} parent=0
    _
  %s5 = ssub.s32 1, %s3
  %s6 = scalar_select 0, %s5, %s3
  $region1: #{tpu_custom_call.1} parent=0
    #allocation2 [shape = 'u8[4096]{0}', space=vmem, size = 0x1000, scoped, tag = 'input window, operand 0, single buffered']
    #allocation3 [shape = 's32[1]{0}', space=sflag, size = 0x4, scoped, tag = 'scoped memory for tpu_custom_call.1']
    #allocation4 [shape = 's32[1]{0}', space=sflag, size = 0x4, scoped, tag = 'scoped memory for tpu_custom_call.1']
    #allocation5 [shape = 'u8[4096]{0}', space=vmem, size = 0x1000, scoped, tag = 'input window, operand 1, single buffered']
    #allocation6 [shape = 's32[1]{0}', space=sflag, size = 0x4, scoped, tag = 'scoped memory for tpu_custom_call.1']
    #allocation7 [shape = 'u8[4096]{0}', space=vmem, size = 0x1000, scoped, tag = 'output window, operand 0, single buffered']
    %7 = vsyncpa [#allocation3], 0
    %8 = vsyncpa [#allocation6], 0
    %9 = vsyncpa [#allocation4], 0
    // Predicated region
    $region2: #{tpu_custom_call.1} parent=1 // pred_check
      _
    $region3: #{tpu_custom_call.1} parent=1 // pred_check_branch
      %11 = sbr.rel (0) target = $region5
    $region4: #{tpu_custom_call.1} parent=1 // pred_region
      %s13 = ssub.s32 128, 128
      %14 = vsyncadd [#allocation3], %s13
      %s16 = sshll.u32 [#allocation2], 4
      %s17 = int_to_ptr.vmem [resolvable:$true] %s16
      %19 = dma.hbm_to_vmem [thread:$0]  %s0, 128, %s17, [#allocation3]
    $region5: #{tpu_custom_call.1} parent=1 // pred_fallthru
      _
    // Predicated region
    $region6: #{tpu_custom_call.1} parent=1 // pred_check
      _
    $region7: #{tpu_custom_call.1} parent=1 // pred_check_branch
      %21 = sbr.rel (0) target = $region9
    $region8: #{tpu_custom_call.1} parent=1 // pred_region
      %s23 = ssub.s32 128, 128
      %24 = vsyncadd [#allocation6], %s23
      %s26 = sshll.u32 [#allocation5], 4
      %s27 = int_to_ptr.vmem [resolvable:$true] %s26
      %29 = dma.hbm_to_vmem [thread:$0]  %s1, 128, %s27, [#allocation6]
    $region9: #{tpu_custom_call.1} parent=1 // pred_fallthru
      _
    // Predicated region
    $region10: #{tpu_custom_call.1} parent=1 // pred_check
      _
    $region11: #{tpu_custom_call.1} parent=1 // pred_check_branch
      %31 = sbr.rel (0) target = $region13
    $region12: #{tpu_custom_call.1} parent=1 // pred_region
      %32 = dma.done [#allocation3], 128
    $region13: #{tpu_custom_call.1} parent=1 // pred_fallthru
      _
    // Predicated region
    $region14: #{tpu_custom_call.1} parent=1 // pred_check
      _
    $region15: #{tpu_custom_call.1} parent=1 // pred_check_branch
      %34 = sbr.rel (0) target = $region17
    $region16: #{tpu_custom_call.1} parent=1 // pred_region
      %35 = dma.done [#allocation6], 128
    $region17: #{tpu_custom_call.1} parent=1 // pred_fallthru
      _
    %v36 = vld [vmem:[#allocation2] sm:$0xff]
    %v37 = vld [vmem:[#allocation5] sm:$0xff]
    %v38 = vadd.f32 %v36, %v37
    %39 = vst [vmem:[#allocation7] sm:$0xff] %v38
    // Predicated region
    $region18: #{tpu_custom_call.1} parent=1 // pred_check
      _
    $region19: #{tpu_custom_call.1} parent=1 // pred_check_branch
      %41 = sbr.rel (0) target = $region21
    $region20: #{tpu_custom_call.1} parent=1 // pred_region
      %s43 = ssub.s32 128, 128
      %44 = vsyncadd [#allocation4], %s43
      %s46 = sshll.u32 [#allocation7], 4
      %s47 = int_to_ptr.vmem [resolvable:$true] %s46
      %49 = dma.vmem_to_hbm [thread:$0]  %s47, 128, %s2, [#allocation4]
    $region21: #{tpu_custom_call.1} parent=1 // pred_fallthru
      _
    // Predicated region
    $region22: #{tpu_custom_call.1} parent=1 // pred_check
      _
    $region23: #{tpu_custom_call.1} parent=1 // pred_check_branch
      %51 = sbr.rel (0) target = $region25
    $region24: #{tpu_custom_call.1} parent=1 // pred_region
      %52 = dma.done [#allocation4], 128
    $region25: #{tpu_custom_call.1} parent=1 // pred_fallthru
      _
    %53 = vsyncpa [#allocation3], 1
    %54 = vsyncpa [#allocation6], 1
    %55 = vsyncpa [#allocation4], 1

// kernel: tpu_custom_call.1
$region0: #{tpu_custom_call.1}
  #allocation0 [shape = 'u32[]', space=smem, size = 0x4, offset = 0x4, fixed_abs, tag = 'smem constant byte address 0x4 - core index']
  #allocation1 [shape = 'u32[144,128]{1,0:T(1,128)}', space=vmem, size = 0x12000, scoped, tag = 'internal scratch']
  %s0 = inlined_call_operand.hbm [shape: f32[2,8,32], index: 0, kind: input, shape index: {}]
  %s1 = inlined_call_operand.hbm [shape: bf16[32,96], index: 1, kind: input, shape index: {}]
  %s2 = inlined_call_operand.vmem [shape: f32[1,96], index: 2, kind: input, shape index: {}]
  %s3 = inlined_call_operand.hbm [shape: bf16[2,8,32], index: 3, kind: output, shape index: {0}]
  %s4 = inlined_call_operand.hbm [shape: bf16[2,8,32], index: 4, kind: output, shape index: {1}]
  %s5 = inlined_call_operand.hbm [shape: bf16[2,8,32], index: 5, kind: output, shape index: {2}]
  %6 = xla_tuple %s3, %s4, %s5
  %s7 = sld [smem:[#allocation0]]
  $region69: #{tpu_custom_call.1} parent=0
    _
  %s9 = ssub.s32 1, %s7
  %s10 = scalar_select 0, %s9, %s7
  $region1: #{tpu_custom_call.1} parent=0
    #allocation2 [shape = 'u8[8192]{0}', space=vmem, size = 0x2000, scoped, tag = 'input window, operand 0']
    #allocation3 [shape = 's32[2]{0}', space=sflag, size = 0x8, scoped, tag = 'scoped memory for tpu_custom_call.1']
    #allocation4 [shape = 's32[2]{0}', space=sflag, size = 0x8, scoped, tag = 'scoped memory for tpu_custom_call.1']
    #allocation5 [shape = 'u8[8192]{0}', space=vmem, size = 0x2000, scoped, tag = 'input window, operand 1, single buffered']
    #allocation6 [shape = 's32[1]{0}', space=sflag, size = 0x4, scoped, tag = 'scoped memory for tpu_custom_call.1']
    #allocation7 [shape = 'u8[4096]{0}', space=vmem, size = 0x1000, scoped, tag = 'output window, operand 0']
    #allocation8 [shape = 'u8[4096]{0}', space=vmem, size = 0x1000, scoped, tag = 'output window, operand 1']
    #allocation9 [shape = 's32[2]{0}', space=sflag, size = 0x8, scoped, tag = 'scoped memory for tpu_custom_call.1']
    #allocation10 [shape = 'u8[4096]{0}', space=vmem, size = 0x1000, scoped, tag = 'output window, operand 2']
    %11 = vsyncpa [#allocation3], 0
    %s12 = scalar_lea.sflag [#allocation3], 1
    %13 = vsyncpa %s12, 0
    %14 = vsyncpa [#allocation6], 0
    %15 = vsyncpa [#allocation4], 0
    %s16 = scalar_lea.sflag [#allocation4], 1
    %17 = vsyncpa %s16, 0
    %18 = vsyncpa [#allocation9], 0
    %s19 = scalar_lea.sflag [#allocation9], 1
    %20 = vsyncpa %s19, 0
    loop: start=0, step=1, limit=4
    $region2: #{tpu_custom_call.1} parent=1 // loop_pre_header
      _
    $region3: #{tpu_custom_call.1} parent=1 // loop_header
      %s22 = sphi 0, %s26
      %p23 = scmp.ge.s32.totalorder %s22, 4
      %s29 = sphi 0, %s41
      %s30 = sphi 0, %s37
      %s31 = sphi 0, %s29
      %s32 = sphi 0, %s30
      %s33 = sphi 0, %s31
      %s34 = sphi 0, %s32
      %s46 = sphi 0, %s48
      %s49 = sphi 0, %s46
      %s50 = sphi 0, %s49
      %s66 = sphi 0, %s50
      %s70 = sphi 0, %s70
      %s72 = sphi 0, %s70
      %s73 = sphi 0, %s72
      %s87 = sphi 0, %s73
      %s91 = sphi 0, %s91
      %s93 = sphi 0, %s91
      %s94 = sphi 0, %s93
      %s108 = sphi 0, %s94
      %s116 = sphi 0, %s118
      %s119 = sphi 0, %s116
      %s120 = sphi 0, %s119
      %s136 = sphi 0, %s120
      %s144 = sphi 0, %s146
      %s147 = sphi 0, %s144
      %s148 = sphi 0, %s147
      %s164 = sphi 0, %s148
      %s172 = sphi 0, %s174
      %s175 = sphi 0, %s172
      %s176 = sphi 0, %s175
      %s192 = sphi 0, %s176
    $region4: #{tpu_custom_call.1} parent=1 // loop_header_branch
      %25 = sbr.rel (%p23) target = $region8
    $region5: #{tpu_custom_call.1} parent=1 // loop_body
      %s27 = ssub.s32 %s22, 1
      %s28 = ssub.s32 %s22, 2
      %s35 = sadd.s32 1, %s30
      %p36 = scmp.ge.s32.totalorder %s35, 1
      %s37 = scalar_select %p36, 0, %s35
      %s38 = sadd.s32 1, %s29
      %s39 = scalar_select %p36, %s38, %s29
      %p40 = scmp.ge.s32.totalorder %s39, 2
      %s41 = scalar_select %p40, 0, %s39
      %s42 = ssub.s32 %s29, %s41
      %s43 = ssub.s32 %s30, %s37
      %s44 = sor.u32 %s42, %s43
      %p45 = scmp.eq.s32.totalorder %s44, 0
      %s47 = sadd.s32 %s46, 1
      %s48 = scalar_select %p45, %s46, %s47
      %p51 = pneg %p45
      %p52 = scmp.eq.s32.totalorder %s22, 1
      %p53 = por %p51, %p52
      %p54 = scmp.ne.s32.totalorder %s46, %s49
      %p55 = scmp.eq.s32.totalorder %s22, 0
      %p56 = por %p54, %p55
      %p57 = scmp.ne.s32.totalorder %s46, %s49
      %p58 = scmp.eq.s32.totalorder %s27, 1
      %p59 = por %p57, %p58
      %p60 = scmp.ne.s32.totalorder %s49, %s50
      %p61 = scmp.eq.s32.totalorder %s27, 0
      %p62 = por %p60, %p61
      %p63 = scmp.ne.s32.totalorder %s49, %s50
      %p64 = scmp.eq.s32.totalorder %s28, 1
      %p65 = por %p63, %p64
      %p67 = scmp.ne.s32.totalorder %s50, %s66
      %p68 = scmp.eq.s32.totalorder %s28, 0
      %p69 = por %p67, %p68
      %s71 = sadd.s32 %s70, 1
      %p74 = scmp.eq.s32.totalorder %s22, 1
      %p75 = scmp.ne.s32.totalorder %s70, %s72
      %p76 = scmp.eq.s32.totalorder %s22, 0
      %p77 = por %p75, %p76
      %p78 = scmp.ne.s32.totalorder %s70, %s72
      %p79 = scmp.eq.s32.totalorder %s27, 1
      %p80 = por %p78, %p79
      %p81 = scmp.ne.s32.totalorder %s72, %s73
      %p82 = scmp.eq.s32.totalorder %s27, 0
      %p83 = por %p81, %p82
      %p84 = scmp.ne.s32.totalorder %s72, %s73
      %p85 = scmp.eq.s32.totalorder %s28, 1
      %p86 = por %p84, %p85
      %p88 = scmp.ne.s32.totalorder %s73, %s87
      %p89 = scmp.eq.s32.totalorder %s28, 0
      %p90 = por %p88, %p89
      %s92 = sadd.s32 %s91, 1
      %p95 = scmp.eq.s32.totalorder %s22, 1
      %p96 = scmp.ne.s32.totalorder %s91, %s93
      %p97 = scmp.eq.s32.totalorder %s22, 0
      %p98 = por %p96, %p97
      %p99 = scmp.ne.s32.totalorder %s91, %s93
      %p100 = scmp.eq.s32.totalorder %s27, 1
      %p101 = por %p99, %p100
      %p102 = scmp.ne.s32.totalorder %s93, %s94
      %p103 = scmp.eq.s32.totalorder %s27, 0
      %p104 = por %p102, %p103
      %p105 = scmp.ne.s32.totalorder %s93, %s94
      %p106 = scmp.eq.s32.totalorder %s28, 1
      %p107 = por %p105, %p106
      %p109 = scmp.ne.s32.totalorder %s94, %s108
      %p110 = scmp.eq.s32.totalorder %s28, 0
      %p111 = por %p109, %p110
      %s112 = ssub.s32 %s29, %s41
      %s113 = ssub.s32 %s30, %s37
      %s114 = sor.u32 %s112, %s113
      %p115 = scmp.eq.s32.totalorder %s114, 0
      %s117 = sadd.s32 %s116, 1
      %s118 = scalar_select %p115, %s116, %s117
      %p121 = pneg %p115
      %p122 = scmp.eq.s32.totalorder %s22, 1
      %p123 = por %p121, %p122
      %p124 = scmp.ne.s32.totalorder %s116, %s119
      %p125 = scmp.eq.s32.totalorder %s22, 0
      %p126 = por %p124, %p125
      %p127 = scmp.ne.s32.totalorder %s116, %s119
      %p128 = scmp.eq.s32.totalorder %s27, 1
      %p129 = por %p127, %p128
      %p130 = scmp.ne.s32.totalorder %s119, %s120
      %p131 = scmp.eq.s32.totalorder %s27, 0
      %p132 = por %p130, %p131
      %p133 = scmp.ne.s32.totalorder %s119, %s120
      %p134 = scmp.eq.s32.totalorder %s28, 1
      %p135 = por %p133, %p134
      %p137 = scmp.ne.s32.totalorder %s120, %s136
      %p138 = scmp.eq.s32.totalorder %s28, 0
      %p139 = por %p137, %p138
      %s140 = ssub.s32 %s29, %s41
      %s141 = ssub.s32 %s30, %s37
      %s142 = sor.u32 %s140, %s141
      %p143 = scmp.eq.s32.totalorder %s142, 0
      %s145 = sadd.s32 %s144, 1
      %s146 = scalar_select %p143, %s144, %s145
      %p149 = pneg %p143
      %p150 = scmp.eq.s32.totalorder %s22, 1
      %p151 = por %p149, %p150
      %p152 = scmp.ne.s32.totalorder %s144, %s147
      %p153 = scmp.eq.s32.totalorder %s22, 0
      %p154 = por %p152, %p153
      %p155 = scmp.ne.s32.totalorder %s144, %s147
      %p156 = scmp.eq.s32.totalorder %s27, 1
      %p157 = por %p155, %p156
      %p158 = scmp.ne.s32.totalorder %s147, %s148
      %p159 = scmp.eq.s32.totalorder %s27, 0
      %p160 = por %p158, %p159
      %p161 = scmp.ne.s32.totalorder %s147, %s148
      %p162 = scmp.eq.s32.totalorder %s28, 1
      %p163 = por %p161, %p162
      %p165 = scmp.ne.s32.totalorder %s148, %s164
      %p166 = scmp.eq.s32.totalorder %s28, 0
      %p167 = por %p165, %p166
      %s168 = ssub.s32 %s29, %s41
      %s169 = ssub.s32 %s30, %s37
      %s170 = sor.u32 %s168, %s169
      %p171 = scmp.eq.s32.totalorder %s170, 0
      %s173 = sadd.s32 %s172, 1
      %s174 = scalar_select %p171, %s172, %s173
      %p177 = pneg %p171
      %p178 = scmp.eq.s32.totalorder %s22, 1
      %p179 = por %p177, %p178
      %p180 = scmp.ne.s32.totalorder %s172, %s175
      %p181 = scmp.eq.s32.totalorder %s22, 0
      %p182 = por %p180, %p181
      %p183 = scmp.ne.s32.totalorder %s172, %s175
      %p184 = scmp.eq.s32.totalorder %s27, 1
      %p185 = por %p183, %p184
      %p186 = scmp.ne.s32.totalorder %s175, %s176
      %p187 = scmp.eq.s32.totalorder %s27, 0
      %p188 = por %p186, %p187
      %p189 = scmp.ne.s32.totalorder %s175, %s176
      %p190 = scmp.eq.s32.totalorder %s28, 1
      %p191 = por %p189, %p190
      %p193 = scmp.ne.s32.totalorder %s176, %s192
      %p194 = scmp.eq.s32.totalorder %s28, 0
      %p195 = por %p193, %p194
      %p196 = scmp.le.s32.totalorder 1, %s22
      %p197 = scmp.lt.s32.totalorder %s22, 3
      %p198 = pnand %p196, %p197
      %p199 = pneg %p198
      // Predicated region
      $region9: #{tpu_custom_call.1} parent=5 // pred_check
        _
      $region10: #{tpu_custom_call.1} parent=5 // pred_check_branch
        %201 = sbr.rel (%p198) target = $region12
      $region11: #{tpu_custom_call.1} parent=5 // pred_region
        %s202 = ssub.s32 %s22, 1
        // Predicated region
        $region13: #{tpu_custom_call.1} parent=11 // pred_check
          %p203 = pneg %p83
        $region14: #{tpu_custom_call.1} parent=11 // pred_check_branch
          %205 = sbr.rel (%p203) target = $region16
        $region15: #{tpu_custom_call.1} parent=11 // pred_region
          %s207 = ssub.s32 256, 256
          %208 = vsyncadd [#allocation6], %s207
          %s209 = sshll.u32 [#allocation5], 4
          %s210 = int_to_ptr.vmem [resolvable:$true] %s209
          %215 = dma.hbm_to_vmem [thread:$0]  %s1, 256, %s210, [#allocation6], 64, 64, 4
        $region16: #{tpu_custom_call.1} parent=11 // pred_fallthru
          _
        // Predicated region
        $region17: #{tpu_custom_call.1} parent=11 // pred_check
          %p216 = pneg %p104
        $region18: #{tpu_custom_call.1} parent=11 // pred_check_branch
          %218 = sbr.rel (%p216) target = $region20
        $region19: #{tpu_custom_call.1} parent=11 // pred_region
          _
        $region20: #{tpu_custom_call.1} parent=11 // pred_fallthru
          _
      $region12: #{tpu_custom_call.1} parent=5 // pred_fallthru
        _
      %p219 = scmp.lt.s32.totalorder %s22, 2
      // Predicated region
      $region21: #{tpu_custom_call.1} parent=5 // pred_check
        %p220 = pneg %p219
      $region22: #{tpu_custom_call.1} parent=5 // pred_check_branch
        %222 = sbr.rel (%p220) target = $region24
      $region23: #{tpu_custom_call.1} parent=5 // pred_region
        // Predicated region
        $region25: #{tpu_custom_call.1} parent=23 // pred_check
          %p223 = pneg %p56
        $region26: #{tpu_custom_call.1} parent=23 // pred_check_branch
          %225 = sbr.rel (%p223) target = $region28
        $region27: #{tpu_custom_call.1} parent=23 // pred_region
          %s226 = sand.u32 %s46, 1
          %s227 = scalar_lea.sflag [#allocation3], %s226
          %s228 = sand.u32 %s46, 1
          %s229 = smul.addr %s228, 8
          %s230 = scalar_lea.vmem [#allocation2], %s229
          %s232 = ssub.s32 128, 128
          %233 = vsyncadd %s227, %s232
          %s234 = sadd.s32 %s30, %s29
          %s235 = smul.addr %s234, 128
          %s236 = scalar_lea.hbm %s0, %s235
          %s238 = sshll.u32 %s230, 4
          %s239 = int_to_ptr.vmem [resolvable:$true] %s238
          %241 = dma.hbm_to_vmem [thread:$0]  %s236, 128, %s239, %s227
        $region28: #{tpu_custom_call.1} parent=23 // pred_fallthru
          _
      $region24: #{tpu_custom_call.1} parent=5 // pred_fallthru
        _
      %p242 = scmp.le.s32.totalorder 1, %s22
      %p243 = scmp.lt.s32.totalorder %s22, 3
      %p244 = pnand %p242, %p243
      %p245 = pneg %p244
      // Predicated region
      $region29: #{tpu_custom_call.1} parent=5 // pred_check
        _
      $region30: #{tpu_custom_call.1} parent=5 // pred_check_branch
        %247 = sbr.rel (%p244) target = $region32
      $region31: #{tpu_custom_call.1} parent=5 // pred_region
        %s248 = ssub.s32 %s22, 1
        %s249 = sand.u32 %s49, 1
        %s250 = scalar_lea.sflag [#allocation3], %s249
        %s251 = sand.u32 %s49, 1
        %s252 = smul.addr %s251, 8
        %s253 = scalar_lea.vmem [#allocation2], %s252
        // Predicated region
        $region33: #{tpu_custom_call.1} parent=31 // pred_check
          %p254 = pneg %p62
        $region34: #{tpu_custom_call.1} parent=31 // pred_check_branch
          %256 = sbr.rel (%p254) target = $region36
        $region35: #{tpu_custom_call.1} parent=31 // pred_region
          %257 = dma.done %s250, 128
        $region36: #{tpu_custom_call.1} parent=31 // pred_fallthru
          _
        // Predicated region
        $region37: #{tpu_custom_call.1} parent=31 // pred_check
          %p258 = pneg %p83
        $region38: #{tpu_custom_call.1} parent=31 // pred_check_branch
          %260 = sbr.rel (%p258) target = $region40
        $region39: #{tpu_custom_call.1} parent=31 // pred_region
          %261 = dma.done [#allocation6], 256
        $region40: #{tpu_custom_call.1} parent=31 // pred_fallthru
          _
        %s262 = sand.u32 %s49, 1
        %s263 = scalar_lea.sflag [#allocation3], %s262
        %s264 = sand.u32 %s49, 1
        %s265 = smul.addr %s264, 8
        %s266 = scalar_lea.vmem [#allocation2], %s265
        %p267 = pneg %p62
        %p268 = pneg %p59
        %p269 = pneg %p83
        %p270 = pneg %p80
        %p271 = pneg %p104
        %p272 = pneg %p101
        %p273 = pneg %p132
        %p274 = pneg %p129
        %s275 = sand.u32 %s119, 1
        %s276 = scalar_lea.sflag [#allocation4], %s275
        %s277 = sand.u32 %s119, 1
        %s278 = smul.addr %s277, 4
        %s279 = scalar_lea.vmem [#allocation7], %s278
        %p280 = pneg %p160
        %p281 = pneg %p157
        %s282 = sand.u32 %s27, 1
        %s283 = scalar_lea.sflag [#allocation9], %s282
        %s284 = sand.u32 %s147, 1
        %s285 = smul.addr %s284, 4
        %s286 = scalar_lea.vmem [#allocation8], %s285
        %p287 = pneg %p188
        %p288 = pneg %p185
        %s289 = sand.u32 %s27, 1
        %s290 = scalar_lea.sflag [#allocation9], %s289
        %s291 = sand.u32 %s175, 1
        %s292 = smul.addr %s291, 4
        %s293 = scalar_lea.vmem [#allocation10], %s292
        %v295 = vld [vmem:[%s253] sm:$0xff]
        %v296 = vpack.c.bf16 %v295, %v295
        %v297 = vld [vmem:[#allocation5] sm:$0xf]
        %v298 = vld [vmem:[#allocation5 + $0x4] sm:$0xf]
        %v299 = vld [vmem:[#allocation5 + $0x8] sm:$0xf]
        %v300 = vld [vmem:[#allocation5 + $0xc] sm:$0xf]
        %v301 = vld [vmem:[%s2] sm:$0x1]
        %v303 = vlaneseq
        %v304 = vshrl.u32 %v303, 7
        %v305 = vsub.s32 0, %v304
        %v306 = vrot.slane %v301, %v305
        %v312 = vunpack.c.l.b16 %v297
        %v313 = vunpack.c.l.b16 %v298
        %v314 = vunpack.c.l.b16 %v299
        %v315 = vunpack.c.l.b16 %v300
        %v316 = vpack.c.b16 %v313, %v312
        %v317 = vpack.c.b16 %v315, %v314
        %vm320 = vcmask 261120
        %v322 = vsel %vm320, %v296, 0
        %324 = vmatprep.subr.bf16.mxu0 0
        %325 = vmatpush1.bf16.msra.mxu0 %v316
        %326 = vmatprep.subr.bf16.mxu0 0
        %327 = vmatpush1.bf16.msra.mxu0 %v317
        %328 = vmatprep.subr.bf16.mxu0 0
        %329 = vmatpush1.bf16.msra.mxu0 0
        %330 = vmatprep.subr.bf16.mxu0 0
        %331 = vmatpush1.bf16.msra.mxu0 0
        %332 = vmatprep.subr.bf16.mxu0 0
        %333 = vmatpush1.bf16.msra.mxu0 0
        %334 = vmatprep.subr.bf16.mxu0 0
        %335 = vmatpush1.bf16.msra.mxu0 0
        %336 = vmatprep.subr.bf16.mxu0 0
        %337 = vmatpush1.bf16.msra.mxu0 0
        %338 = vmatprep.subr.bf16.mxu0 0
        %339 = vmatpush1.bf16.msra.mxu0 0
        %340 = vmatprep.subr.bf16.mxu0 0
        %341 = vmatpush1.bf16.msra.mxu0 0
        %342 = vmatprep.subr.bf16.mxu0 0
        %343 = vmatpush1.bf16.msra.mxu0 0
        %344 = vmatprep.subr.bf16.mxu0 0
        %345 = vmatpush1.bf16.msra.mxu0 0
        %346 = vmatprep.subr.bf16.mxu0 0
        %347 = vmatpush1.bf16.msra.mxu0 0
        %348 = vmatprep.subr.bf16.mxu0 0
        %349 = vmatpush1.bf16.msra.mxu0 0
        %350 = vmatprep.subr.bf16.mxu0 0
        %351 = vmatpush1.bf16.msra.mxu0 0
        %352 = vmatprep.subr.bf16.mxu0 0
        %353 = vmatpush1.bf16.msra.mxu0 0
        %354 = vmatprep.subr.bf16.mxu0 0
        %355 = vmatpush1.bf16.msra.mxu0 0
        %356 = vmatprep.mubr.bf16.mxu0 0
        %357 = vmatmul.mubr.bf16.gmra.mrb[0].mxu0 %v322
        %v358 = vpop.f32.mrb[0].mxu0
        %v359 = vadd.f32 %v306, %v358
        %v360 = vpop.f32.mrb[0].mxu0
        %v361 = vpop.f32.mrb[0].mxu0
        %v362 = vpop.f32.mrb[0].mxu0
        %363 = vdwg.mxu0
        %v364 = vpack.c.bf16 %v359, %v359
        %vm365 = vcmask 257024
        %366 = vst.msk [vmem:[%s279] sm:$0xf] %vm365, %v364
        %v368 = vunpack.c.l.b16 %v364
        %v369 = vpack.c.b16 %v368, %v368
        %370 = vrot.lane.b32.xlu0 %v369, 96
        %v371 = vpop.permute.xlu0 %370
        %373 = vst.msk [vmem:[%s286] sm:$0xf] %vm365, %v371
        %374 = vrot.lane.b32.xlu0 %v369, 64
        %v375 = vpop.permute.xlu0 %374
        %377 = vst.msk [vmem:[%s293] sm:$0xf] %vm365, %v375
        %s378 = sand.u32 %s119, 1
        %s379 = scalar_lea.sflag [#allocation4], %s378
        %s380 = sand.u32 %s119, 1
        %s381 = smul.addr %s380, 4
        %s382 = scalar_lea.vmem [#allocation7], %s381
        %s383 = sand.u32 %s27, 1
        %s384 = scalar_lea.sflag [#allocation9], %s383
        %s385 = sand.u32 %s147, 1
        %s386 = smul.addr %s385, 4
        %s387 = scalar_lea.vmem [#allocation8], %s386
        %s388 = sand.u32 %s27, 1
        %s389 = scalar_lea.sflag [#allocation9], %s388
        %s390 = sand.u32 %s175, 1
        %s391 = smul.addr %s390, 4
        %s392 = scalar_lea.vmem [#allocation10], %s391
        // Predicated region
        $region41: #{tpu_custom_call.1} parent=31 // pred_check
          %p393 = pneg %p129
        $region42: #{tpu_custom_call.1} parent=31 // pred_check_branch
          %395 = sbr.rel (%p393) target = $region44
        $region43: #{tpu_custom_call.1} parent=31 // pred_region
          %s397 = ssub.s32 64, 64
          %398 = vsyncadd %s379, %s397
          %s399 = sadd.s32 %s32, %s31
          %s400 = smul.addr %s399, 64
          %s401 = scalar_lea.hbm %s3, %s400
          %s403 = sshll.u32 %s382, 4
          %s404 = int_to_ptr.vmem [resolvable:$true] %s403
          %406 = dma.vmem_to_hbm [thread:$0]  %s404, 64, %s401, %s379
        $region44: #{tpu_custom_call.1} parent=31 // pred_fallthru
          _
        // Predicated region
        $region45: #{tpu_custom_call.1} parent=31 // pred_check
          %p407 = pneg %p157
        $region46: #{tpu_custom_call.1} parent=31 // pred_check_branch
          %409 = sbr.rel (%p407) target = $region48
        $region47: #{tpu_custom_call.1} parent=31 // pred_region
          %s411 = ssub.s32 64, 64
          %412 = vsyncadd %s384, %s411
          %s413 = sadd.s32 %s32, %s31
          %s414 = smul.addr %s413, 64
          %s415 = scalar_lea.hbm %s4, %s414
          %s417 = sshll.u32 %s387, 4
          %s418 = int_to_ptr.vmem [resolvable:$true] %s417
          %420 = dma.vmem_to_hbm [thread:$0]  %s418, 64, %s415, %s384
        $region48: #{tpu_custom_call.1} parent=31 // pred_fallthru
          _
        // Predicated region
        $region49: #{tpu_custom_call.1} parent=31 // pred_check
          %p421 = pneg %p185
        $region50: #{tpu_custom_call.1} parent=31 // pred_check_branch
          %423 = sbr.rel (%p421) target = $region52
        $region51: #{tpu_custom_call.1} parent=31 // pred_region
          %s425 = ssub.s32 64, 64
          %426 = vsyncadd %s389, %s425
          %s427 = sadd.s32 %s32, %s31
          %s428 = smul.addr %s427, 64
          %s429 = scalar_lea.hbm %s5, %s428
          %s431 = sshll.u32 %s392, 4
          %s432 = int_to_ptr.vmem [resolvable:$true] %s431
          %434 = dma.vmem_to_hbm [thread:$0]  %s432, 64, %s429, %s389
        $region52: #{tpu_custom_call.1} parent=31 // pred_fallthru
          _
      $region32: #{tpu_custom_call.1} parent=5 // pred_fallthru
        _
      %p435 = scmp.le.s32.totalorder 2, %s22
      // Predicated region
      $region53: #{tpu_custom_call.1} parent=5 // pred_check
        %p436 = pneg %p435
      $region54: #{tpu_custom_call.1} parent=5 // pred_check_branch
        %438 = sbr.rel (%p436) target = $region56
      $region55: #{tpu_custom_call.1} parent=5 // pred_region
        %s439 = ssub.s32 %s22, 2
        // Predicated region
        $region57: #{tpu_custom_call.1} parent=55 // pred_check
          %p440 = pneg %p135
        $region58: #{tpu_custom_call.1} parent=55 // pred_check_branch
          %442 = sbr.rel (%p440) target = $region60
        $region59: #{tpu_custom_call.1} parent=55 // pred_region
          %s443 = sand.u32 %s120, 1
          %s444 = scalar_lea.sflag [#allocation4], %s443
          %s445 = sand.u32 %s120, 1
          %s446 = smul.addr %s445, 4
          %s447 = scalar_lea.vmem [#allocation7], %s446
          %448 = dma.done %s444, 64
        $region60: #{tpu_custom_call.1} parent=55 // pred_fallthru
          _
        // Predicated region
        $region61: #{tpu_custom_call.1} parent=55 // pred_check
          %p449 = pneg %p163
        $region62: #{tpu_custom_call.1} parent=55 // pred_check_branch
          %451 = sbr.rel (%p449) target = $region64
        $region63: #{tpu_custom_call.1} parent=55 // pred_region
          %s452 = sand.u32 %s28, 1
          %s453 = scalar_lea.sflag [#allocation9], %s452
          %s454 = sand.u32 %s148, 1
          %s455 = smul.addr %s454, 4
          %s456 = scalar_lea.vmem [#allocation8], %s455
          %457 = dma.done %s453, 64
        $region64: #{tpu_custom_call.1} parent=55 // pred_fallthru
          _
        // Predicated region
        $region65: #{tpu_custom_call.1} parent=55 // pred_check
          %p458 = pneg %p191
        $region66: #{tpu_custom_call.1} parent=55 // pred_check_branch
          %460 = sbr.rel (%p458) target = $region68
        $region67: #{tpu_custom_call.1} parent=55 // pred_region
          %s461 = sand.u32 %s28, 1
          %s462 = scalar_lea.sflag [#allocation9], %s461
          %s463 = sand.u32 %s176, 1
          %s464 = smul.addr %s463, 4
          %s465 = scalar_lea.vmem [#allocation10], %s464
          %466 = dma.done %s462, 64
        $region68: #{tpu_custom_call.1} parent=55 // pred_fallthru
          _
      $region56: #{tpu_custom_call.1} parent=5 // pred_fallthru
        _
    $region6: #{tpu_custom_call.1} parent=1 // loop_footer
      %s26 = sadd.s32 1, %s22
    $region7: #{tpu_custom_call.1} parent=1 // loop_footer_branch
      %21 = sbr.rel target = $region3
    $region8: #{tpu_custom_call.1} parent=1 // loop_exit
      _
    %467 = vsyncpa [#allocation3], 1
    %s468 = scalar_lea.sflag [#allocation3], 1
    %469 = vsyncpa %s468, 1
    %470 = vsyncpa [#allocation6], 1
    %471 = vsyncpa [#allocation4], 1
    %s472 = scalar_lea.sflag [#allocation4], 1
    %473 = vsyncpa %s472, 1
    %474 = vsyncpa [#allocation9], 1
    %s475 = scalar_lea.sflag [#allocation9], 1
    %476 = vsyncpa %s475, 1

</llo_original>
